<compile_context>
chip_gen: v6e
topology: v6e:2x2x1
jax: 0.10.0
libtpu: 0.0.40
codegen_flags: <defaults>
</compile_context>

<pallas_src>
import math
import functools

import jax
import jax.numpy as jnp
from jax.experimental import pallas as pl
from jax.experimental.pallas import tpu as pltpu


def _gelu_exact(x):
    # PyTorch nn.GELU() default = exact erf formulation (computed in f32).
    return 0.5 * x * (1.0 + jax.lax.erf(x * (1.0 / math.sqrt(2.0))))


def _round_up(x, m):
    return (x + m - 1) // m * m


def _pad2(a, rows, cols):
    """Zero-pad a 2-D array up to (rows, cols); no-op (no copy) when already sized."""
    if a.shape == (rows, cols):
        return a
    return jnp.pad(a, ((0, rows - a.shape[0]), (0, cols - a.shape[1])))


def _device_defaults():
    """Per-generation (row tile, hidden tile, VMEM cap bytes, #TensorCores)."""
    try:
        kind = jax.devices()[0].device_kind.lower()
    except Exception:  # pragma: no cover - defensive
        kind = ""
    mib = 1024 * 1024
    if "v7" in kind:
        # 64 MiB VMEM / TC, 2 TCs/chip, ~3.2 TB/s HBM: modest tm bump, tight VMEM.
        return 384, 256, 56 * mib, 2
    if "v6" in kind or "trillium" in kind:
        # 128 MiB VMEM, ~1.4 TB/s HBM: needs large row tiles to be compute-bound.
        return 512, 512, 100 * mib, 1
    if "v5 lite" in kind or "v5e" in kind or "v5lite" in kind:
        # 128 MiB VMEM; tm=256 already at the AI knee, big th cuts acc RMW traffic.
        return 256, 512, 100 * mib, 1
    if "v2" in kind or "v3" in kind:
        return 256, 256, 12 * mib, 1
    # v4 / v5p / unknown: roomy but conservative.
    return 512, 256, 96 * mib, 1


def _mlp_kernel_accum_out(x_ref, w1_ref, b1_ref, w2_ref, b2_ref, o_ref):
    """f32 output: accumulate directly into the resident output block (no scratch)."""
    k = pl.program_id(1)

    @pl.when(k == 0)
    def _():
        o_ref[...] = jnp.broadcast_to(b2_ref[...].astype(o_ref.dtype), o_ref.shape)

    h = jnp.dot(x_ref[...], w1_ref[...], preferred_element_type=jnp.float32)
    h = _gelu_exact(h + b1_ref[...].astype(jnp.float32))
    # Dropout(p=0.0) is identity in both train and eval; nothing to do.
    o_ref[...] += jnp.dot(h.astype(w2_ref.dtype), w2_ref[...],
                          preferred_element_type=jnp.float32)


def _mlp_kernel_scratch_acc(x_ref, w1_ref, b1_ref, w2_ref, b2_ref, o_ref, acc_ref):
    """Non-f32 (e.g. bf16) output: accumulate in f32 scratch, finalize on last k."""
    k = pl.program_id(1)

    @pl.when(k == 0)
    def _():
        acc_ref[...] = jnp.zeros_like(acc_ref)

    h = jnp.dot(x_ref[...], w1_ref[...], preferred_element_type=jnp.float32)
    h = _gelu_exact(h + b1_ref[...].astype(jnp.float32))
    acc_ref[...] += jnp.dot(h.astype(w2_ref.dtype), w2_ref[...],
                            preferred_element_type=jnp.float32)

    @pl.when(k == pl.num_programs(1) - 1)
    def _():
        o_ref[...] = (acc_ref[...] +
                      b2_ref[...].astype(jnp.float32)).astype(o_ref.dtype)


@functools.partial(jax.jit, static_argnames=("tm", "th"))
def mlp_pallas(x, w1, b1, w2, b2, *, tm=None, th=None):
    """x: (..., in_features). w1: (in, hidden), w2: (hidden, out). Returns (..., out).

    Prefer bf16 operands on the hot path: f32 weights both halve the roofline
    arithmetic intensity and cut MXU throughput on all generations.
    """
    in_features = x.shape[-1]
    hidden = w1.shape[1]
    out_features = w2.shape[1]
    lead = x.shape[:-1]
    m = int(math.prod(lead)) if lead else 1
    x2 = x.reshape(m, in_features)
    out_dtype = x.dtype
    needs_acc = out_dtype != jnp.float32

    tm_def, th_def, vmem_cap, n_tc = _device_defaults()
    tm = tm_def if tm is None else tm
    th = th_def if th is None else th

    # ---- lane-aligned padded feature dims (lane-dense, unmasked stores) ----
    c_pad = _round_up(in_features, 128)
    o_pad = _round_up(out_features, 128)

    # ---- initial tile sizes (16 covers the bf16 sublane minimum) ----
    tm_eff = min(tm, _round_up(m, 16))
    th_eff = min(th, _round_up(hidden, 128))

    x_item = jnp.dtype(x.dtype).itemsize
    w_item = jnp.dtype(w1.dtype).itemsize
    o_item = jnp.dtype(out_dtype).itemsize

    def vmem_need(tm_e, th_e):
        b = 2 * tm_e * c_pad * x_item           # x tile (double-buffered)
        b += 2 * c_pad * th_e * w_item          # w1 stripe
        b += 2 * 8 * th_e * w_item              # b1 stripe (sublane-padded)
        b += 2 * th_e * o_pad * w_item          # w2 stripe
        b += 2 * 8 * o_pad * w_item             # b2
        b += 2 * tm_e * o_pad * o_item          # output tile
        if needs_acc:
            b += tm_e * o_pad * 4               # f32 accumulator (single-buffered)
        return b

    # Shrink th, then tm, until the footprint fits this generation's budget.
    budget = int(vmem_cap * 0.85)
    while vmem_need(tm_eff, th_eff) > budget and th_eff > 128:
        th_eff = max(128, th_eff // 2)
    while vmem_need(tm_eff, th_eff) > budget and tm_eff > 128:
        tm_eff = max(128, tm_eff // 2)

    # Megacore: on 2-TC parts make sure the parallel M axis has >= 2 tiles so
    # the second core is not idle for small-M / decode shapes.
    if n_tc >= 2 and m > 16 and _round_up(m, tm_eff) // tm_eff < 2:
        tm_eff = min(tm_eff, _round_up(-(-m // 2), 16))

    m_pad = _round_up(m, tm_eff)
    h_pad = _round_up(hidden, th_eff)
    grid_m = m_pad // tm_eff
    grid_h = h_pad // th_eff

    # ---- conditional zero-padding (no-op / no copy when already aligned) ----
    x2p = _pad2(x2, m_pad, c_pad)
    w1p = _pad2(w1, c_pad, h_pad)
    b1p = _pad2(b1.reshape(1, hidden), 1, h_pad)
    w2p = _pad2(w2, h_pad, o_pad)
    b2p = _pad2(b2.reshape(1, out_features), 1, o_pad)

    # w1/w2 (and biases) are re-streamed once per row tile.
    bytes_accessed = (
        m_pad * c_pad * x_item
        + grid_m * (c_pad * h_pad + h_pad * o_pad) * w_item
        + grid_m * (h_pad + o_pad) * w_item
        + m_pad * o_pad * o_item)
    cost = pl.CostEstimate(
        flops=2 * m_pad * c_pad * h_pad + 2 * m_pad * h_pad * o_pad,
        transcendentals=m_pad * h_pad,
        bytes_accessed=bytes_accessed)

    # VMEM limit derived from the actual tile footprint (+30% headroom),
    # never below the stock 32 MiB, never above the per-generation cap.
    vmem_limit = int(min(vmem_cap,
                         max(vmem_need(tm_eff, th_eff) * 1.3, 32 * 1024 * 1024)))

    kernel = _mlp_kernel_scratch_acc if needs_acc else _mlp_kernel_accum_out
    scratch = ([pltpu.VMEM((tm_eff, o_pad), jnp.float32)] if needs_acc else [])

    out_p = pl.pallas_call(
        kernel,
        out_shape=jax.ShapeDtypeStruct((m_pad, o_pad), out_dtype),
        grid_spec=pltpu.PrefetchScalarGridSpec(
            num_scalar_prefetch=0,
            grid=(grid_m, grid_h),
            in_specs=[
                pl.BlockSpec((tm_eff, c_pad), lambda i, k: (i, 0)),   # x tile (resident over k)
                pl.BlockSpec((c_pad, th_eff), lambda i, k: (0, k)),   # w1 stripe
                pl.BlockSpec((1, th_eff),     lambda i, k: (0, k)),   # b1 stripe
                pl.BlockSpec((th_eff, o_pad), lambda i, k: (k, 0)),   # w2 stripe
                pl.BlockSpec((1, o_pad),      lambda i, k: (0, 0)),   # b2
            ],
            out_specs=pl.BlockSpec((tm_eff, o_pad), lambda i, k: (i, 0)),
            scratch_shapes=scratch,
        ),
        compiler_params=pltpu.CompilerParams(
            # M axis parallel (megacore), H axis is the reduction.
            dimension_semantics=("parallel", "arbitrary"),
            vmem_limit_bytes=vmem_limit,
        ),
        cost_estimate=cost,
    )(x2p, w1p, b1p, w2p, b2p)

    out2 = out_p
    if m_pad != m or o_pad != out_features:
        out2 = out_p[:m, :out_features]
    return out2.reshape(*lead, out_features)


def init_mlp_params(key, in_features, hidden_features, out_features, dtype=jnp.float32):
    """nn.Linear-style init (uniform +/- 1/sqrt(fan_in)); weights stored (in, out)."""
    k1, k2, k3, k4 = jax.random.split(key, 4)
    bound1 = 1.0 / math.sqrt(in_features)
    bound2 = 1.0 / math.sqrt(hidden_features)
    w1 = jax.random.uniform(k1, (in_features, hidden_features), dtype, -bound1, bound1)
    b1 = jax.random.uniform(k2, (hidden_features,), dtype, -bound1, bound1)
    w2 = jax.random.uniform(k3, (hidden_features, out_features), dtype, -bound2, bound2)
    b2 = jax.random.uniform(k4, (out_features,), dtype, -bound2, bound2)
    return w1, b1, w2, b2


def mlp_reference(x, w1, b1, w2, b2):
    h = x @ w1 + b1
    h = _gelu_exact(h)
    return h @ w2 + b2


if __name__ == "__main__":
    batch, seq = 2, 8
    in_features, hidden_features, out_features = 32, 64, 32

    key = jax.random.PRNGKey(0)
    kx, kp = jax.random.split(key)
    x = jax.random.normal(kx, (batch, seq, in_features), jnp.float32)
    w1, b1, w2, b2 = init_mlp_params(kp, in_features, hidden_features, out_features)

    # fp32 path (accumulates directly into the resident output block)
    out = jax.block_until_ready(mlp_pallas(x, w1, b1, w2, b2))
    ref = mlp_reference(x, w1, b1, w2, b2)
    assert out.shape == (batch, seq, out_features)
    assert jnp.allclose(out, ref, atol=1e-4, rtol=1e-4), "fp32 mismatch vs reference"

    # ragged M path (batch*seq not divisible by the row tile -> zero-pad + slice)
    x_odd = jax.random.normal(kx, (3, 7, in_features), jnp.float32)
    out_odd = jax.block_until_ready(mlp_pallas(x_odd, w1, b1, w2, b2))
    ref_odd = mlp_reference(x_odd, w1, b1, w2, b2)
    assert jnp.allclose(out_odd, ref_odd, atol=1e-4, rtol=1e-4), "ragged-M mismatch"

    # bf16 operands (f32 accumulation in scratch); loose tolerance vs fp32 reference
    out_bf16 = jax.block_until_ready(
        mlp_pallas(x.astype(jnp.bfloat16),
                   w1.astype(jnp.bfloat16), b1.astype(jnp.bfloat16),
                   w2.astype(jnp.bfloat16), b2.astype(jnp.bfloat16)))
    assert out_bf16.dtype == jnp.bfloat16
    assert jnp.allclose(out_bf16.astype(jnp.float32), ref, atol=1e-1, rtol=1e-1), \
        "bf16 mismatch vs reference"

    print("KERNEL_OK")
</pallas_src>

<mosaic_0001>
module attributes {stable_mosaic.version = 11 : i64} {
  func.func @_mlp_kernel_accum_out(%arg0: i32, %arg1: i32, %arg2: memref<16x128xf32, #tpu.memory_space<vmem>>, %arg3: memref<128x128xf32, #tpu.memory_space<vmem>>, %arg4: memref<1x128xf32, #tpu.memory_space<vmem>>, %arg5: memref<128x128xf32, #tpu.memory_space<vmem>>, %arg6: memref<1x128xf32, #tpu.memory_space<vmem>>, %arg7: memref<16x128xf32, #tpu.memory_space<vmem>>) attributes {dimension_semantics = [#tpu.dimension_semantics<parallel>, #tpu.dimension_semantics<arbitrary>], iteration_bounds = array<i64: 1, 1>, scalar_prefetch = 0 : i64, scratch_operands = 0 : i64, tpu.core_type = #tpu.core_type<tc>, window_params = [{transform_indices = @transform_0, window_bounds = array<i64: 16, 128>}, {transform_indices = @transform_1, window_bounds = array<i64: 128, 128>}, {transform_indices = @transform_2, window_bounds = array<i64: 1, 128>}, {transform_indices = @transform_3, window_bounds = array<i64: 128, 128>}, {pipeline_mode = #tpu.pipeline_mode<synchronous>, transform_indices = @transform_4, window_bounds = array<i64: 1, 128>}, {transform_indices = @transform_5, window_bounds = array<i64: 16, 128>}]} {
    %c0_i32 = arith.constant 0 : i32
    %0 = arith.cmpi eq, %arg1, %c0_i32 : i32
    %1 = arith.extui %0 : i1 to i32
    %c0_i32_0 = arith.constant 0 : i32
    %2 = arith.cmpi ne, %1, %c0_i32_0 : i32
    scf.if %2 {
      %c0_16 = arith.constant 0 : index
      %c0_17 = arith.constant 0 : index
      %22 = vector.load %arg6[%c0_16, %c0_17] : memref<1x128xf32, #tpu.memory_space<vmem>>, vector<1x128xf32>
      %23 = vector.shape_cast %22 : vector<1x128xf32> to vector<1x128xf32>
      %24 = vector.broadcast %23 : vector<1x128xf32> to vector<16x128xf32>
      %c0_18 = arith.constant 0 : index
      %c0_19 = arith.constant 0 : index
      %25 = vector.load %arg7[%c0_18, %c0_19] : memref<16x128xf32, #tpu.memory_space<vmem>>, vector<16x128xf32>
      tpu.vector_store %arg7[%c0_18, %c0_19], %24 {strides = array<i32>} : memref<16x128xf32, #tpu.memory_space<vmem>>, vector<16x128xf32>,
    } else {
    }
    %c0 = arith.constant 0 : index
    %c0_1 = arith.constant 0 : index
    %3 = vector.load %arg2[%c0, %c0_1] : memref<16x128xf32, #tpu.memory_space<vmem>>, vector<16x128xf32>
    %c0_2 = arith.constant 0 : index
    %c0_3 = arith.constant 0 : index
    %4 = vector.load %arg3[%c0_2, %c0_3] : memref<128x128xf32, #tpu.memory_space<vmem>>, vector<128x128xf32>
    %cst = arith.constant dense<0.000000e+00> : vector<16x128xf32>
    %5 = tpu.matmul %3, %4, %cst {dimension_numbers = #tpu.dot_dimension_numbers<[1], [0], [0], [1], [0, 0, 1, 1], [], []>} : vector<16x128xf32>, vector<128x128xf32>, vector<16x128xf32> -> vector<16x128xf32>
    %c0_4 = arith.constant 0 : index
    %c0_5 = arith.constant 0 : index
    %6 = vector.load %arg4[%c0_4, %c0_5] : memref<1x128xf32, #tpu.memory_space<vmem>>, vector<1x128xf32>
    %7 = vector.broadcast %6 : vector<1x128xf32> to vector<16x128xf32>
    %8 = arith.addf %5, %7 : vector<16x128xf32>
    %cst_6 = arith.constant 5.000000e-01 : f32
    %9 = vector.broadcast %cst_6 : f32 to vector<16x128xf32>
    %10 = arith.mulf %9, %8 : vector<16x128xf32>
    %cst_7 = arith.constant 0.707106769 : f32
    %11 = vector.broadcast %cst_7 : f32 to vector<16x128xf32>
    %12 = arith.mulf %8, %11 : vector<16x128xf32>
    %13 = math.erf %12 : vector<16x128xf32>
    %cst_8 = arith.constant 1.000000e+00 : f32
    %14 = vector.broadcast %cst_8 : f32 to vector<16x128xf32>
    %15 = arith.addf %14, %13 : vector<16x128xf32>
    %16 = arith.mulf %10, %15 : vector<16x128xf32>
    %c0_9 = arith.constant 0 : index
    %c0_10 = arith.constant 0 : index
    %17 = vector.load %arg7[%c0_9, %c0_10] : memref<16x128xf32, #tpu.memory_space<vmem>>, vector<16x128xf32>
    %c0_11 = arith.constant 0 : index
    %c0_12 = arith.constant 0 : index
    %18 = vector.load %arg5[%c0_11, %c0_12] : memref<128x128xf32, #tpu.memory_space<vmem>>, vector<128x128xf32>
    %cst_13 = arith.constant dense<0.000000e+00> : vector<16x128xf32>
    %19 = tpu.matmul %16, %18, %cst_13 {dimension_numbers = #tpu.dot_dimension_numbers<[1], [0], [0], [1], [0, 0, 1, 1], [], []>} : vector<16x128xf32>, vector<128x128xf32>, vector<16x128xf32> -> vector<16x128xf32>
    %20 = arith.addf %17, %19 : vector<16x128xf32>
    %c0_14 = arith.constant 0 : index
    %c0_15 = arith.constant 0 : index
    %21 = vector.load %arg7[%c0_14, %c0_15] : memref<16x128xf32, #tpu.memory_space<vmem>>, vector<16x128xf32>
    tpu.vector_store %arg7[%c0_14, %c0_15], %20 {strides = array<i32>} : memref<16x128xf32, #tpu.memory_space<vmem>>, vector<16x128xf32>,
    return
  }
  func.func @transform_0(%arg0: i32, %arg1: i32) -> (i32, i32) {
    %c0_i32 = arith.constant 0 : i32
    %c0_i32_0 = arith.constant 0 : i32
    return %arg0, %c0_i32 : i32, i32
  }
  func.func @transform_1(%arg0: i32, %arg1: i32) -> (i32, i32) {
    %c0_i32 = arith.constant 0 : i32
    %c0_i32_0 = arith.constant 0 : i32
    return %c0_i32, %arg1 : i32, i32
  }
  func.func @transform_2(%arg0: i32, %arg1: i32) -> (i32, i32) {
    %c0_i32 = arith.constant 0 : i32
    %c0_i32_0 = arith.constant 0 : i32
    return %c0_i32, %arg1 : i32, i32
  }
  func.func @transform_3(%arg0: i32, %arg1: i32) -> (i32, i32) {
    %c0_i32 = arith.constant 0 : i32
    %c0_i32_0 = arith.constant 0 : i32
    return %arg1, %c0_i32 : i32, i32
  }
  func.func @transform_4(%arg0: i32, %arg1: i32) -> (i32, i32) {
    %c0_i32 = arith.constant 0 : i32
    %c0_i32_0 = arith.constant 0 : i32
    %c0_i32_1 = arith.constant 0 : i32
    return %c0_i32, %c0_i32_0 : i32, i32
  }
  func.func @transform_5(%arg0: i32, %arg1: i32) -> (i32, i32) {
    %c0_i32 = arith.constant 0 : i32
    %c0_i32_0 = arith.constant 0 : i32
    return %arg0, %c0_i32 : i32, i32
  }
}

</mosaic_0001>

<llo_original>
// kernel: mlp_pallas.1
$region0: #{mlp_pallas.1}
  #allocation0 [shape = 'u32[]', space=smem, size = 0x4, offset = 0x4, fixed_abs, tag = 'smem constant byte address 0x4 - core index']
  #allocation1 [shape = 'u32[144,128]{1,0:T(1,128)}', space=vmem, size = 0x12000, scoped, tag = 'internal scratch']
  %s0 = inlined_call_operand.vmem [shape: f32[16,128], index: 0, kind: input, shape index: {}]
  %s1 = inlined_call_operand.vmem [shape: f32[128,128], index: 1, kind: input, shape index: {}]
  %s2 = inlined_call_operand.vmem [shape: f32[1,128], index: 2, kind: input, shape index: {}]
  %s3 = inlined_call_operand.vmem [shape: f32[128,128], index: 3, kind: input, shape index: {}]
  %s4 = inlined_call_operand.vmem [shape: f32[1,128], index: 4, kind: input, shape index: {}]
  %s5 = inlined_call_operand.vmem [shape: f32[16,128], index: 5, kind: output, shape index: {}]
  %s6 = sld [smem:[#allocation0]]
  $region34: #{mlp_pallas.1} parent=0
    _
  %s8 = ssub.s32 1, %s6
  %s9 = scalar_select 0, %s8, %s6
  // Predicated region
  $region2: #{mlp_pallas.1} parent=0 // pred_check
    _
  $region3: #{mlp_pallas.1} parent=0 // pred_check_branch
    %11 = sbr.rel (0) target = $region5
  $region4: #{mlp_pallas.1} parent=0 // pred_region
    _
  $region5: #{mlp_pallas.1} parent=0 // pred_fallthru
    _
  // Predicated region
  $region6: #{mlp_pallas.1} parent=0 // pred_check
    _
  $region7: #{mlp_pallas.1} parent=0 // pred_check_branch
    %13 = sbr.rel (0) target = $region9
  $region8: #{mlp_pallas.1} parent=0 // pred_region
    _
  $region9: #{mlp_pallas.1} parent=0 // pred_fallthru
    _
  // Predicated region
  $region10: #{mlp_pallas.1} parent=0 // pred_check
    _
  $region11: #{mlp_pallas.1} parent=0 // pred_check_branch
    %15 = sbr.rel (0) target = $region13
  $region12: #{mlp_pallas.1} parent=0 // pred_region
    _
  $region13: #{mlp_pallas.1} parent=0 // pred_fallthru
    _
  // Predicated region
  $region14: #{mlp_pallas.1} parent=0 // pred_check
    _
  $region15: #{mlp_pallas.1} parent=0 // pred_check_branch
    %17 = sbr.rel (0) target = $region17
  $region16: #{mlp_pallas.1} parent=0 // pred_region
    _
  $region17: #{mlp_pallas.1} parent=0 // pred_fallthru
    _
  // Predicated region
  $region18: #{mlp_pallas.1} parent=0 // pred_check
    _
  $region19: #{mlp_pallas.1} parent=0 // pred_check_branch
    %19 = sbr.rel (0) target = $region21
  $region20: #{mlp_pallas.1} parent=0 // pred_region
    _
  $region21: #{mlp_pallas.1} parent=0 // pred_fallthru
    _
  %p20 = scmp.eq.s32.totalorder 0, 0
  // Predicated region
  $region22: #{mlp_pallas.1} parent=0 // pred_check
    %p21 = pneg %p20
  $region23: #{mlp_pallas.1} parent=0 // pred_check_branch
    %23 = sbr.rel (%p21) target = $region25
  $region24: #{mlp_pallas.1} parent=0 // pred_region
    %v24 = vld [vmem:[%s4] sm:$0x1]
    %v26 = vlaneseq
    %v27 = vshrl.u32 %v26, 7
    %v28 = vsub.s32 0, %v27
    %v29 = vrot.slane %v24, %v28
    %31 = vst [vmem:[%s5] sm:$0xff] %v29
    %32 = vst [vmem:[%s5 + $0x8] sm:$0xff] %v29
  $region25: #{mlp_pallas.1} parent=0 // pred_fallthru
    _
  %v33 = vld [vmem:[%s0] sm:$0xff]
  %v34 = vld [vmem:[%s0 + $0x8] sm:$0xff]
  %v35 = vld [vmem:[%s1] sm:$0xff]
  %v36 = vld [vmem:[%s1 + $0x8] sm:$0xff]
  %v37 = vld [vmem:[%s1 + $0x10] sm:$0xff]
  %v38 = vld [vmem:[%s1 + $0x18] sm:$0xff]
  %v39 = vld [vmem:[%s1 + $0x20] sm:$0xff]
  %v40 = vld [vmem:[%s1 + $0x28] sm:$0xff]
  %v41 = vld [vmem:[%s1 + $0x30] sm:$0xff]
  %v42 = vld [vmem:[%s1 + $0x38] sm:$0xff]
  %v43 = vld [vmem:[%s1 + $0x40] sm:$0xff]
  %v44 = vld [vmem:[%s1 + $0x48] sm:$0xff]
  %v45 = vld [vmem:[%s1 + $0x50] sm:$0xff]
  %v46 = vld [vmem:[%s1 + $0x58] sm:$0xff]
  %v47 = vld [vmem:[%s1 + $0x60] sm:$0xff]
  %v48 = vld [vmem:[%s1 + $0x68] sm:$0xff]
  %v49 = vld [vmem:[%s1 + $0x70] sm:$0xff]
  %v50 = vld [vmem:[%s1 + $0x78] sm:$0xff]
  %v51 = vld [vmem:[%s2] sm:$0x1]
  %v53 = vlaneseq
  %v54 = vshrl.u32 %v53, 7
  %v55 = vsub.s32 0, %v54
  %v56 = vrot.slane %v51, %v55
  %58 = vmatprep.subr.mxu0 0.0
  %59 = vmatpush1.msra.mxu0 %v50
  %60 = vmatprep.subr.mxu0 0.0
  %61 = vmatpush1.msra.mxu0 %v49
  %62 = vmatprep.subr.mxu0 0.0
  %63 = vmatpush1.msra.mxu0 %v48
  %64 = vmatprep.subr.mxu0 0.0
  %65 = vmatpush1.msra.mxu0 %v47
  %66 = vmatprep.subr.mxu0 0.0
  %67 = vmatpush1.msra.mxu0 %v46
  %68 = vmatprep.subr.mxu0 0.0
  %69 = vmatpush1.msra.mxu0 %v45
  %70 = vmatprep.subr.mxu0 0.0
  %71 = vmatpush1.msra.mxu0 %v44
  %72 = vmatprep.subr.mxu0 0.0
  %73 = vmatpush1.msra.mxu0 %v43
  %74 = vmatprep.subr.mxu0 0.0
  %75 = vmatpush1.msra.mxu0 %v42
  %76 = vmatprep.subr.mxu0 0.0
  %77 = vmatpush1.msra.mxu0 %v41
  %78 = vmatprep.subr.mxu0 0.0
  %79 = vmatpush1.msra.mxu0 %v40
  %80 = vmatprep.subr.mxu0 0.0
  %81 = vmatpush1.msra.mxu0 %v39
  %82 = vmatprep.subr.mxu0 0.0
  %83 = vmatpush1.msra.mxu0 %v38
  %84 = vmatprep.subr.mxu0 0.0
  %85 = vmatpush1.msra.mxu0 %v37
  %86 = vmatprep.subr.mxu0 0.0
  %87 = vmatpush1.msra.mxu0 %v36
  %88 = vmatprep.subr.mxu0 0.0
  %89 = vmatpush1.msra.mxu0 %v35
  %90 = vmatprep.subr.mxu0 0.0
  %91 = vmatpush2.msra.mxu0 0.0
  %92 = vmatprep.subr.mxu0 0.0
  %93 = vmatpush2.msra.mxu0 0.0
  %94 = vmatprep.subr.mxu0 0.0
  %95 = vmatpush2.msra.mxu0 0.0
  %96 = vmatprep.subr.mxu0 0.0
  %97 = vmatpush2.msra.mxu0 0.0
  %98 = vmatprep.subr.mxu0 0.0
  %99 = vmatpush2.msra.mxu0 0.0
  %100 = vmatprep.subr.mxu0 0.0
  %101 = vmatpush2.msra.mxu0 0.0
  %102 = vmatprep.subr.mxu0 0.0
  %103 = vmatpush2.msra.mxu0 0.0
  %104 = vmatprep.subr.mxu0 0.0
  %105 = vmatpush2.msra.mxu0 0.0
  %106 = vmatprep.subr.mxu0 0.0
  %107 = vmatpush2.msra.mxu0 0.0
  %108 = vmatprep.subr.mxu0 0.0
  %109 = vmatpush2.msra.mxu0 0.0
  %110 = vmatprep.subr.mxu0 0.0
  %111 = vmatpush2.msra.mxu0 0.0
  %112 = vmatprep.subr.mxu0 0.0
  %113 = vmatpush2.msra.mxu0 0.0
  %114 = vmatprep.subr.mxu0 0.0
  %115 = vmatpush2.msra.mxu0 0.0
  %116 = vmatprep.subr.mxu0 0.0
  %117 = vmatpush2.msra.mxu0 0.0
  %118 = vmatprep.subr.mxu0 0.0
  %119 = vmatpush2.msra.mxu0 0.0
  %120 = vmatprep.subr.mxu0 0.0
  %121 = vmatpush2.msra.mxu0 0.0
  %122 = vmatprep.mubr.f32.mxu0 0.0
  %123 = vmatmul.mubr.f32.gmra.mxu0 %v33
  %v124 = vpop.f32.mrf.mxu0
  %v125 = vadd.f32 %v56, %v124
  %v126 = vpop.f32.mrf.mxu0
  %127 = vmatprep.mubr.f32.mxu0 0.0
  %128 = vmatmul.mubr.f32.gmra.mxu0 %v34
  %v129 = vpop.f32.mrf.mxu0
  %v130 = vadd.f32 %v56, %v129
  %v131 = vpop.f32.mrf.mxu0
  %132 = vdwg.mxu0
  %v133 = vmul.f32 %v125, 0.5
  %v134 = vmul.f32 %v130, 0.5
  %v135 = vmul.f32 %v125, 0.70710677
  %v136 = vmul.f32 %v130, 0.70710677
  %v137 = verf.f32.pop %v135
  %v138 = verf.f32.pop %v136
  %v139 = vadd.f32 %v137, 1.0
  %v140 = vadd.f32 %v138, 1.0
  %v141 = vmul.f32 %v133, %v139
  %v142 = vmul.f32 %v134, %v140
  %v143 = vld [vmem:[%s5] sm:$0xff]
  %v144 = vld [vmem:[%s5 + $0x8] sm:$0xff]
  %v145 = vld [vmem:[%s3] sm:$0xff]
  %v146 = vld [vmem:[%s3 + $0x8] sm:$0xff]
  %v147 = vld [vmem:[%s3 + $0x10] sm:$0xff]
  %v148 = vld [vmem:[%s3 + $0x18] sm:$0xff]
  %v149 = vld [vmem:[%s3 + $0x20] sm:$0xff]
  %v150 = vld [vmem:[%s3 + $0x28] sm:$0xff]
  %v151 = vld [vmem:[%s3 + $0x30] sm:$0xff]
  %v152 = vld [vmem:[%s3 + $0x38] sm:$0xff]
  %v153 = vld [vmem:[%s3 + $0x40] sm:$0xff]
  %v154 = vld [vmem:[%s3 + $0x48] sm:$0xff]
  %v155 = vld [vmem:[%s3 + $0x50] sm:$0xff]
  %v156 = vld [vmem:[%s3 + $0x58] sm:$0xff]
  %v157 = vld [vmem:[%s3 + $0x60] sm:$0xff]
  %v158 = vld [vmem:[%s3 + $0x68] sm:$0xff]
  %v159 = vld [vmem:[%s3 + $0x70] sm:$0xff]
  %v160 = vld [vmem:[%s3 + $0x78] sm:$0xff]
  %161 = vmatprep.subr.mxu0 0.0
  %162 = vmatpush1.msra.mxu0 %v160
  %163 = vmatprep.subr.mxu0 0.0
  %164 = vmatpush1.msra.mxu0 %v159
  %165 = vmatprep.subr.mxu0 0.0
  %166 = vmatpush1.msra.mxu0 %v158
  %167 = vmatprep.subr.mxu0 0.0
  %168 = vmatpush1.msra.mxu0 %v157
  %169 = vmatprep.subr.mxu0 0.0
  %170 = vmatpush1.msra.mxu0 %v156
  %171 = vmatprep.subr.mxu0 0.0
  %172 = vmatpush1.msra.mxu0 %v155
  %173 = vmatprep.subr.mxu0 0.0
  %174 = vmatpush1.msra.mxu0 %v154
  %175 = vmatprep.subr.mxu0 0.0
  %176 = vmatpush1.msra.mxu0 %v153
  %177 = vmatprep.subr.mxu0 0.0
  %178 = vmatpush1.msra.mxu0 %v152
  %179 = vmatprep.subr.mxu0 0.0
  %180 = vmatpush1.msra.mxu0 %v151
  %181 = vmatprep.subr.mxu0 0.0
  %182 = vmatpush1.msra.mxu0 %v150
  %183 = vmatprep.subr.mxu0 0.0
  %184 = vmatpush1.msra.mxu0 %v149
  %185 = vmatprep.subr.mxu0 0.0
  %186 = vmatpush1.msra.mxu0 %v148
  %187 = vmatprep.subr.mxu0 0.0
  %188 = vmatpush1.msra.mxu0 %v147
  %189 = vmatprep.subr.mxu0 0.0
  %190 = vmatpush1.msra.mxu0 %v146
  %191 = vmatprep.subr.mxu0 0.0
  %192 = vmatpush1.msra.mxu0 %v145
  %193 = vmatprep.subr.mxu0 0.0
  %194 = vmatpush2.msra.mxu0 0.0
  %195 = vmatprep.subr.mxu0 0.0
  %196 = vmatpush2.msra.mxu0 0.0
  %197 = vmatprep.subr.mxu0 0.0
  %198 = vmatpush2.msra.mxu0 0.0
  %199 = vmatprep.subr.mxu0 0.0
  %200 = vmatpush2.msra.mxu0 0.0
  %201 = vmatprep.subr.mxu0 0.0
  %202 = vmatpush2.msra.mxu0 0.0
  %203 = vmatprep.subr.mxu0 0.0
  %204 = vmatpush2.msra.mxu0 0.0
  %205 = vmatprep.subr.mxu0 0.0
  %206 = vmatpush2.msra.mxu0 0.0
  %207 = vmatprep.subr.mxu0 0.0
  %208 = vmatpush2.msra.mxu0 0.0
  %209 = vmatprep.subr.mxu0 0.0
  %210 = vmatpush2.msra.mxu0 0.0
  %211 = vmatprep.subr.mxu0 0.0
  %212 = vmatpush2.msra.mxu0 0.0
  %213 = vmatprep.subr.mxu0 0.0
  %214 = vmatpush2.msra.mxu0 0.0
  %215 = vmatprep.subr.mxu0 0.0
  %216 = vmatpush2.msra.mxu0 0.0
  %217 = vmatprep.subr.mxu0 0.0
  %218 = vmatpush2.msra.mxu0 0.0
  %219 = vmatprep.subr.mxu0 0.0
  %220 = vmatpush2.msra.mxu0 0.0
  %221 = vmatprep.subr.mxu0 0.0
  %222 = vmatpush2.msra.mxu0 0.0
  %223 = vmatprep.subr.mxu0 0.0
  %224 = vmatpush2.msra.mxu0 0.0
  %225 = vmatprep.mubr.f32.mxu0 0.0
  %226 = vmatmul.mubr.f32.gmra.mxu0 %v141
  %v227 = vpop.f32.mrf.mxu0
  %v228 = vadd.f32 0.0, %v227
  %v229 = vpop.f32.mrf.mxu0
  %230 = vmatprep.mubr.f32.mxu0 0.0
  %231 = vmatmul.mubr.f32.gmra.mxu0 %v142
  %v232 = vpop.f32.mrf.mxu0
  %v233 = vadd.f32 0.0, %v232
  %v234 = vpop.f32.mrf.mxu0
  %235 = vdwg.mxu0
  %v236 = vadd.f32 %v143, %v228
  %v237 = vadd.f32 %v144, %v233
  %238 = vst [vmem:[%s5] sm:$0xff] %v236
  %239 = vst [vmem:[%s5 + $0x8] sm:$0xff] %v237
  // Predicated region
  $region26: #{mlp_pallas.1} parent=0 // pred_check
    _
  $region27: #{mlp_pallas.1} parent=0 // pred_check_branch
    %241 = sbr.rel (0) target = $region29
  $region28: #{mlp_pallas.1} parent=0 // pred_region
    _
  $region29: #{mlp_pallas.1} parent=0 // pred_fallthru
    _
  // Predicated region
  $region30: #{mlp_pallas.1} parent=0 // pred_check
    _
  $region31: #{mlp_pallas.1} parent=0 // pred_check_branch
    %243 = sbr.rel (0) target = $region33
  $region32: #{mlp_pallas.1} parent=0 // pred_region
    _
  $region33: #{mlp_pallas.1} parent=0 // pred_fallthru
    _

</llo_original>
